<compile_context>
chip_gen: v5e
topology: v5e:2x2
jax: 0.10.0
libtpu: 0.0.40
codegen_flags: <defaults>
</compile_context>

<pallas_src>
import functools

import jax
import jax.numpy as jnp
from jax.experimental import pallas as pl
from jax.experimental.pallas import tpu as pltpu


def _round_up(x, m):
    return ((x + m - 1) // m) * m


def dann_kernel(src_ref, tar_ref, w1_ref, b1_ref, w2_ref, b2_ref,
                y_ref, xsrc_ref, xtar_ref):
    """One batch tile: layer_input + bias -> dropout(eval: identity) -> ReLU for
    both src and tar rows; layer_hidden only for src rows."""
    w_dtype = w1_ref.dtype
    b1 = b1_ref[...].astype(jnp.float32)

    # layer_input on src rows (MXU, f32 accumulation).
    h_src = jnp.dot(src_ref[...].astype(w_dtype), w1_ref[...],
                    preferred_element_type=jnp.float32) + b1
    # dropout(p=0.5) in eval mode == identity; then ReLU. Lane-dense store.
    xsrc_ref[...] = jnp.maximum(h_src, 0.0).astype(xsrc_ref.dtype)

    # layer_input on tar rows. layer_hidden is intentionally NOT computed for
    # tar rows (the reference model discards it), saving ~50% of layer-2 MXU
    # work and the corresponding y HBM writeback.
    h_tar = jnp.dot(tar_ref[...].astype(w_dtype), w1_ref[...],
                    preferred_element_type=jnp.float32) + b1
    xtar_ref[...] = jnp.maximum(h_tar, 0.0).astype(xtar_ref.dtype)

    # layer_hidden on src rows only. Read the activation back from its VMEM
    # output buffer so the f32 accumulator h_src can be retired before the
    # second matmul (reduces vld/vst pressure and spills at large tiles).
    y = jnp.dot(xsrc_ref[...].astype(w2_ref.dtype), w2_ref[...],
                preferred_element_type=jnp.float32) + b2_ref[...].astype(jnp.float32)
    y_ref[...] = y.astype(y_ref.dtype)


def _choose_batch_tiling(B, per_row_bytes, resident_bytes, sublane):
    """Pick (tile_b, B_pad, n_tiles) under a conservative VMEM budget."""
    budget = 40 << 20                        # headroom inside v7x's 64 MiB VMEM
    avail = max(budget - resident_bytes, 4 << 20)
    cap = max(sublane, min(512, (avail // per_row_bytes) // sublane * sublane))
    if B <= cap and B < 256:
        return B, B, 1                       # one full-extent block, no row pad
    # >= 2 grid steps so dimension_semantics=("parallel",) can shard the batch
    # across v7x's two TensorCores (harmless on single-TC v5e/v6e).
    n_tiles = max(2, pl.cdiv(B, cap))
    tile_b = _round_up(pl.cdiv(B, n_tiles), sublane)
    return tile_b, tile_b * n_tiles, n_tiles


@functools.partial(jax.jit, static_argnames=("n_hidden", "n_class"))
def _dann_forward(src, tar, w1p, b1p, w2p, b2p, *, n_hidden, n_class):
    B, n_input = src.shape
    H_pad = w1p.shape[1]
    C_pad = w2p.shape[1]
    out_dtype = src.dtype

    in_item = jnp.dtype(src.dtype).itemsize
    w_item = jnp.dtype(w1p.dtype).itemsize
    b_item = jnp.dtype(b1p.dtype).itemsize
    out_item = jnp.dtype(out_dtype).itemsize
    sublane = 16 if in_item == 2 else 8

    # Per-grid-step VMEM (double-buffered tiles) + resident weight footprint
    # (counted 2x to stay conservative about pipeline buffer allocation).
    per_row_bytes = 2 * (2 * n_input * in_item + (2 * H_pad + C_pad) * out_item)
    resident_bytes = 2 * ((n_input * H_pad + H_pad * C_pad) * w_item
                          + (H_pad + C_pad) * b_item)

    tile_b, B_pad, n_tiles = _choose_batch_tiling(
        B, per_row_bytes, resident_bytes, sublane)

    # Row padding is only needed for multi-tile grids (tiny, zero rows).
    if B_pad != B:
        src_p = jnp.pad(src, ((0, B_pad - B), (0, 0)))
        tar_p = jnp.pad(tar, ((0, B_pad - B), (0, 0)))
    else:
        src_p, tar_p = src, tar

    grid = (n_tiles,)
    in_specs = [
        pl.BlockSpec((tile_b, n_input), lambda i: (i, 0)),   # src batch tile
        pl.BlockSpec((tile_b, n_input), lambda i: (i, 0)),   # tar batch tile
        pl.BlockSpec((n_input, H_pad), lambda i: (0, 0)),    # W1 (VMEM resident)
        pl.BlockSpec((1, H_pad), lambda i: (0, 0)),          # b1 (resident)
        pl.BlockSpec((H_pad, C_pad), lambda i: (0, 0)),      # W2 (resident)
        pl.BlockSpec((1, C_pad), lambda i: (0, 0)),          # b2 (resident)
    ]
    out_specs = (
        pl.BlockSpec((tile_b, C_pad), lambda i: (i, 0)),     # y_src
        pl.BlockSpec((tile_b, H_pad), lambda i: (i, 0)),     # x_src_mmd
        pl.BlockSpec((tile_b, H_pad), lambda i: (i, 0)),     # x_tar_mmd
    )
    out_shapes = (
        jax.ShapeDtypeStruct((B_pad, C_pad), out_dtype),
        jax.ShapeDtypeStruct((B_pad, H_pad), out_dtype),
        jax.ShapeDtypeStruct((B_pad, H_pad), out_dtype),
    )

    flops = 2 * (2 * B_pad) * n_input * H_pad + 2 * B_pad * H_pad * C_pad
    bytes_accessed = (in_item * 2 * B_pad * n_input
                      + w_item * (n_input * H_pad + H_pad * C_pad)
                      + b_item * (H_pad + C_pad)
                      + out_item * B_pad * (C_pad + 2 * H_pad))
    cost = pl.CostEstimate(flops=flops, transcendentals=0,
                           bytes_accessed=bytes_accessed)

    vmem_limit = int(min(64 << 20,
                         max(32 << 20,
                             tile_b * per_row_bytes + resident_bytes + (4 << 20))))

    y_pad, xsrc_pad, xtar_pad = pl.pallas_call(
        dann_kernel,
        out_shape=out_shapes,
        grid=grid,
        in_specs=in_specs,
        out_specs=out_specs,
        compiler_params=pltpu.CompilerParams(
            dimension_semantics=("parallel",),
            vmem_limit_bytes=vmem_limit),
        cost_estimate=cost,
    )(src_p, tar_p, w1p, b1p, w2p, b2p)

    # Strip lane padding / row padding.
    y_src = y_pad[:B, :n_class]
    x_src_mmd = xsrc_pad[:B, :n_hidden]
    x_tar_mmd = xtar_pad[:B, :n_hidden]
    return y_src, x_src_mmd, x_tar_mmd


class DaNNPallas:
    """Fused DaNN forward. Weight padding/casting is done ONCE at construction.

    compute_dtype=jnp.bfloat16 halves weight HBM/VMEM traffic on v6e/v7x while
    keeping f32 accumulation, bias add, ReLU and all output stores.
    """

    def __init__(self, w1, b1, w2, b2, compute_dtype=None):
        n_input, n_hidden = w1.shape
        n_class = w2.shape[1]
        self.n_hidden = int(n_hidden)
        self.n_class = int(n_class)
        H_pad = _round_up(self.n_hidden, 128)
        C_pad = _round_up(self.n_class, 128)
        w_dtype = compute_dtype if compute_dtype is not None else w1.dtype
        # Zero-padded columns keep results exact; padding is sliced off in the
        # wrapper. Biases stay f32 so the bias add stays f32 even in bf16 mode.
        self.w1p = jnp.asarray(
            jnp.pad(w1, ((0, 0), (0, H_pad - self.n_hidden))), dtype=w_dtype)
        self.b1p = jnp.pad(b1, ((0, 0), (0, H_pad - self.n_hidden)))
        self.w2p = jnp.asarray(
            jnp.pad(w2, ((0, H_pad - self.n_hidden), (0, C_pad - self.n_class))),
            dtype=w_dtype)
        self.b2p = jnp.pad(b2, ((0, 0), (0, C_pad - self.n_class)))

    def __call__(self, src, tar):
        return _dann_forward(src, tar, self.w1p, self.b1p, self.w2p, self.b2p,
                             n_hidden=self.n_hidden, n_class=self.n_class)


def dann_reference(src, tar, w1, b1, w2, b2):
    x_src_mmd = jnp.maximum(src @ w1 + b1, 0.0)
    x_tar_mmd = jnp.maximum(tar @ w1 + b1, 0.0)
    y_src = x_src_mmd @ w2 + b2
    return y_src, x_src_mmd, x_tar_mmd


if __name__ == "__main__":
    # Small shapes consistent with DaNN(n_input, n_hidden, n_class)
    B, n_input, n_hidden, n_class = 8, 128, 64, 16

    key = jax.random.PRNGKey(0)
    k_src, k_tar, k_w1, k_b1, k_w2, k_b2 = jax.random.split(key, 6)

    src = jax.random.normal(k_src, (B, n_input), dtype=jnp.float32)
    tar = jax.random.normal(k_tar, (B, n_input), dtype=jnp.float32)

    # Deterministic "Linear" parameters (uniform ~ PyTorch default fan-in range);
    # weights stored as [in_features, out_features] (transposed from nn.Linear).
    bound1 = 1.0 / (n_input ** 0.5)
    w1 = jax.random.uniform(k_w1, (n_input, n_hidden), jnp.float32, -bound1, bound1)
    b1 = jax.random.uniform(k_b1, (1, n_hidden), jnp.float32, -bound1, bound1)

    bound2 = 1.0 / (n_hidden ** 0.5)
    w2 = jax.random.uniform(k_w2, (n_hidden, n_class), jnp.float32, -bound2, bound2)
    b2 = jax.random.uniform(k_b2, (1, n_class), jnp.float32, -bound2, bound2)

    y_ref, xs_ref, xt_ref = dann_reference(src, tar, w1, b1, w2, b2)

    # ---- f32 path: exact vs. reference --------------------------------------
    model_f32 = DaNNPallas(w1, b1, w2, b2)
    y_src, x_src_mmd, x_tar_mmd = jax.block_until_ready(model_f32(src, tar))
    assert jnp.allclose(y_src, y_ref, atol=1e-5, rtol=1e-5)
    assert jnp.allclose(x_src_mmd, xs_ref, atol=1e-5, rtol=1e-5)
    assert jnp.allclose(x_tar_mmd, xt_ref, atol=1e-5, rtol=1e-5)

    # ---- bf16-weight path (v6e/v7x bandwidth optimization), f32 accumulation -
    model_bf16 = DaNNPallas(w1, b1, w2, b2, compute_dtype=jnp.bfloat16)
    y16, xs16, xt16 = jax.block_until_ready(model_bf16(src, tar))
    assert jnp.allclose(y16, y_ref, atol=3e-2, rtol=3e-2)
    assert jnp.allclose(xs16, xs_ref, atol=3e-2, rtol=3e-2)
    assert jnp.allclose(xt16, xt_ref, atol=3e-2, rtol=3e-2)

    print("KERNEL_OK")
</pallas_src>

<mosaic_0001>
module attributes {stable_mosaic.version = 11 : i64} {
  func.func @dann_kernel(%arg0: i32, %arg1: memref<8x128xf32, #tpu.memory_space<vmem>>, %arg2: memref<8x128xf32, #tpu.memory_space<vmem>>, %arg3: memref<128x128xf32, #tpu.memory_space<vmem>>, %arg4: memref<1x128xf32, #tpu.memory_space<vmem>>, %arg5: memref<128x128xf32, #tpu.memory_space<vmem>>, %arg6: memref<1x128xf32, #tpu.memory_space<vmem>>, %arg7: memref<8x128xf32, #tpu.memory_space<vmem>>, %arg8: memref<8x128xf32, #tpu.memory_space<vmem>>, %arg9: memref<8x128xf32, #tpu.memory_space<vmem>>) attributes {dimension_semantics = [#tpu.dimension_semantics<parallel>], iteration_bounds = array<i64: 1>, scalar_prefetch = 0 : i64, scratch_operands = 0 : i64, tpu.core_type = #tpu.core_type<tc>, window_params = [{transform_indices = @transform_0, window_bounds = array<i64: 8, 128>}, {transform_indices = @transform_1, window_bounds = array<i64: 8, 128>}, {pipeline_mode = #tpu.pipeline_mode<synchronous>, transform_indices = @transform_2, window_bounds = array<i64: 128, 128>}, {pipeline_mode = #tpu.pipeline_mode<synchronous>, transform_indices = @transform_3, window_bounds = array<i64: 1, 128>}, {pipeline_mode = #tpu.pipeline_mode<synchronous>, transform_indices = @transform_4, window_bounds = array<i64: 128, 128>}, {pipeline_mode = #tpu.pipeline_mode<synchronous>, transform_indices = @transform_5, window_bounds = array<i64: 1, 128>}, {transform_indices = @transform_6, window_bounds = array<i64: 8, 128>}, {transform_indices = @transform_7, window_bounds = array<i64: 8, 128>}, {transform_indices = @transform_8, window_bounds = array<i64: 8, 128>}]} {
    %c0 = arith.constant 0 : index
    %c0_0 = arith.constant 0 : index
    %0 = vector.load %arg4[%c0, %c0_0] : memref<1x128xf32, #tpu.memory_space<vmem>>, vector<1x128xf32>
    %c0_1 = arith.constant 0 : index
    %c0_2 = arith.constant 0 : index
    %1 = vector.load %arg1[%c0_1, %c0_2] : memref<8x128xf32, #tpu.memory_space<vmem>>, vector<8x128xf32>
    %c0_3 = arith.constant 0 : index
    %c0_4 = arith.constant 0 : index
    %2 = vector.load %arg3[%c0_3, %c0_4] : memref<128x128xf32, #tpu.memory_space<vmem>>, vector<128x128xf32>
    %cst = arith.constant dense<0.000000e+00> : vector<8x128xf32>
    %3 = tpu.matmul %1, %2, %cst {dimension_numbers = #tpu.dot_dimension_numbers<[1], [0], [0], [1], [0, 0, 1, 1], [], []>} : vector<8x128xf32>, vector<128x128xf32>, vector<8x128xf32> -> vector<8x128xf32>
    %4 = vector.broadcast %0 : vector<1x128xf32> to vector<8x128xf32>
    %5 = arith.addf %3, %4 : vector<8x128xf32>
    %cst_5 = arith.constant 0.000000e+00 : f32
    %6 = vector.broadcast %cst_5 : f32 to vector<8x128xf32>
    %7 = arith.maximumf %5, %6 : vector<8x128xf32>
    %c0_6 = arith.constant 0 : index
    %c0_7 = arith.constant 0 : index
    %8 = vector.load %arg8[%c0_6, %c0_7] : memref<8x128xf32, #tpu.memory_space<vmem>>, vector<8x128xf32>
    tpu.vector_store %arg8[%c0_6, %c0_7], %7 {strides = array<i32>} : memref<8x128xf32, #tpu.memory_space<vmem>>, vector<8x128xf32>,
    %c0_8 = arith.constant 0 : index
    %c0_9 = arith.constant 0 : index
    %9 = vector.load %arg2[%c0_8, %c0_9] : memref<8x128xf32, #tpu.memory_space<vmem>>, vector<8x128xf32>
    %c0_10 = arith.constant 0 : index
    %c0_11 = arith.constant 0 : index
    %10 = vector.load %arg3[%c0_10, %c0_11] : memref<128x128xf32, #tpu.memory_space<vmem>>, vector<128x128xf32>
    %cst_12 = arith.constant dense<0.000000e+00> : vector<8x128xf32>
    %11 = tpu.matmul %9, %10, %cst_12 {dimension_numbers = #tpu.dot_dimension_numbers<[1], [0], [0], [1], [0, 0, 1, 1], [], []>} : vector<8x128xf32>, vector<128x128xf32>, vector<8x128xf32> -> vector<8x128xf32>
    %12 = vector.broadcast %0 : vector<1x128xf32> to vector<8x128xf32>
    %13 = arith.addf %11, %12 : vector<8x128xf32>
    %cst_13 = arith.constant 0.000000e+00 : f32
    %14 = vector.broadcast %cst_13 : f32 to vector<8x128xf32>
    %15 = arith.maximumf %13, %14 : vector<8x128xf32>
    %c0_14 = arith.constant 0 : index
    %c0_15 = arith.constant 0 : index
    %16 = vector.load %arg9[%c0_14, %c0_15] : memref<8x128xf32, #tpu.memory_space<vmem>>, vector<8x128xf32>
    tpu.vector_store %arg9[%c0_14, %c0_15], %15 {strides = array<i32>} : memref<8x128xf32, #tpu.memory_space<vmem>>, vector<8x128xf32>,
    %c0_16 = arith.constant 0 : index
    %c0_17 = arith.constant 0 : index
    %17 = vector.load %arg8[%c0_16, %c0_17] : memref<8x128xf32, #tpu.memory_space<vmem>>, vector<8x128xf32>
    %c0_18 = arith.constant 0 : index
    %c0_19 = arith.constant 0 : index
    %18 = vector.load %arg5[%c0_18, %c0_19] : memref<128x128xf32, #tpu.memory_space<vmem>>, vector<128x128xf32>
    %cst_20 = arith.constant dense<0.000000e+00> : vector<8x128xf32>
    %19 = tpu.matmul %17, %18, %cst_20 {dimension_numbers = #tpu.dot_dimension_numbers<[1], [0], [0], [1], [0, 0, 1, 1], [], []>} : vector<8x128xf32>, vector<128x128xf32>, vector<8x128xf32> -> vector<8x128xf32>
    %c0_21 = arith.constant 0 : index
    %c0_22 = arith.constant 0 : index
    %20 = vector.load %arg6[%c0_21, %c0_22] : memref<1x128xf32, #tpu.memory_space<vmem>>, vector<1x128xf32>
    %21 = vector.broadcast %20 : vector<1x128xf32> to vector<8x128xf32>
    %22 = arith.addf %19, %21 : vector<8x128xf32>
    %c0_23 = arith.constant 0 : index
    %c0_24 = arith.constant 0 : index
    %23 = vector.load %arg7[%c0_23, %c0_24] : memref<8x128xf32, #tpu.memory_space<vmem>>, vector<8x128xf32>
    tpu.vector_store %arg7[%c0_23, %c0_24], %22 {strides = array<i32>} : memref<8x128xf32, #tpu.memory_space<vmem>>, vector<8x128xf32>,
    return
  }
  func.func @transform_0(%arg0: i32) -> (i32, i32) {
    %c0_i32 = arith.constant 0 : i32
    %c0_i32_0 = arith.constant 0 : i32
    return %arg0, %c0_i32 : i32, i32
  }
  func.func @transform_1(%arg0: i32) -> (i32, i32) {
    %c0_i32 = arith.constant 0 : i32
    %c0_i32_0 = arith.constant 0 : i32
    return %arg0, %c0_i32 : i32, i32
  }
  func.func @transform_2(%arg0: i32) -> (i32, i32) {
    %c0_i32 = arith.constant 0 : i32
    %c0_i32_0 = arith.constant 0 : i32
    %c0_i32_1 = arith.constant 0 : i32
    return %c0_i32, %c0_i32_0 : i32, i32
  }
  func.func @transform_3(%arg0: i32) -> (i32, i32) {
    %c0_i32 = arith.constant 0 : i32
    %c0_i32_0 = arith.constant 0 : i32
    %c0_i32_1 = arith.constant 0 : i32
    return %c0_i32, %c0_i32_0 : i32, i32
  }
  func.func @transform_4(%arg0: i32) -> (i32, i32) {
    %c0_i32 = arith.constant 0 : i32
    %c0_i32_0 = arith.constant 0 : i32
    %c0_i32_1 = arith.constant 0 : i32
    return %c0_i32, %c0_i32_0 : i32, i32
  }
  func.func @transform_5(%arg0: i32) -> (i32, i32) {
    %c0_i32 = arith.constant 0 : i32
    %c0_i32_0 = arith.constant 0 : i32
    %c0_i32_1 = arith.constant 0 : i32
    return %c0_i32, %c0_i32_0 : i32, i32
  }
  func.func @transform_6(%arg0: i32) -> (i32, i32) {
    %c0_i32 = arith.constant 0 : i32
    %c0_i32_0 = arith.constant 0 : i32
    return %arg0, %c0_i32 : i32, i32
  }
  func.func @transform_7(%arg0: i32) -> (i32, i32) {
    %c0_i32 = arith.constant 0 : i32
    %c0_i32_0 = arith.constant 0 : i32
    return %arg0, %c0_i32 : i32, i32
  }
  func.func @transform_8(%arg0: i32) -> (i32, i32) {
    %c0_i32 = arith.constant 0 : i32
    %c0_i32_0 = arith.constant 0 : i32
    return %arg0, %c0_i32 : i32, i32
  }
}

</mosaic_0001>

<llo_original>
// kernel: _dann_forward.1
$region0: #{_dann_forward.1}
  #allocation0 [shape = 'u32[]', space=smem, size = 0x4, offset = 0x4, fixed_abs, tag = 'smem constant byte address 0x4 - core index']
  #allocation1 [shape = 'u32[72,128]{1,0:T(1,128)}', space=vmem, size = 0x9000, scoped, tag = 'internal scratch']
  %s0 = inlined_call_operand.hbm [shape: f32[8,128], index: 0, kind: input, shape index: {}]
  %s1 = inlined_call_operand.hbm [shape: f32[8,128], index: 1, kind: input, shape index: {}]
  %s2 = inlined_call_operand.hbm [shape: f32[128,128], index: 2, kind: input, shape index: {}]
  %s3 = inlined_call_operand.vmem [shape: f32[1,128], index: 3, kind: input, shape index: {}]
  %s4 = inlined_call_operand.hbm [shape: f32[128,128], index: 4, kind: input, shape index: {}]
  %s5 = inlined_call_operand.vmem [shape: f32[1,128], index: 5, kind: input, shape index: {}]
  %s6 = inlined_call_operand.hbm [shape: f32[8,128], index: 6, kind: output, shape index: {0}]
  %s7 = inlined_call_operand.hbm [shape: f32[8,128], index: 7, kind: output, shape index: {1}]
  %s8 = inlined_call_operand.hbm [shape: f32[8,128], index: 8, kind: output, shape index: {2}]
  %9 = xla_tuple %s6, %s7, %s8
  %s10 = sld [smem:[#allocation0]]
  $region66: #{_dann_forward.1} parent=0
    _
  %s12 = ssub.s32 1, %s10
  %s13 = scalar_select 0, %s12, %s10
  $region1: #{_dann_forward.1} parent=0
    #allocation2 [shape = 'u8[4096]{0}', space=vmem, size = 0x1000, scoped, tag = 'input window, operand 0, single buffered']
    #allocation3 [shape = 's32[1]{0}', space=sflag, size = 0x4, scoped, tag = 'scoped memory for _dann_forward.1']
    #allocation4 [shape = 's32[1]{0}', space=sflag, size = 0x4, scoped, tag = 'scoped memory for _dann_forward.1']
    #allocation5 [shape = 'u8[4096]{0}', space=vmem, size = 0x1000, scoped, tag = 'input window, operand 1, single buffered']
    #allocation6 [shape = 's32[1]{0}', space=sflag, size = 0x4, scoped, tag = 'scoped memory for _dann_forward.1']
    #allocation7 [shape = 'u8[65536]{0}', space=vmem, size = 0x10000, scoped, tag = 'input window, operand 2, single buffered']
    #allocation8 [shape = 'u8[65536]{0}', space=vmem, size = 0x10000, scoped, tag = 'input window, operand 4, single buffered']
    #allocation9 [shape = 's32[1]{0}', space=sflag, size = 0x4, scoped, tag = 'scoped memory for _dann_forward.1']
    #allocation10 [shape = 'u8[4096]{0}', space=vmem, size = 0x1000, scoped, tag = 'output window, operand 0, single buffered']
    #allocation11 [shape = 'u8[4096]{0}', space=vmem, size = 0x1000, scoped, tag = 'output window, operand 1, single buffered']
    #allocation12 [shape = 's32[1]{0}', space=sflag, size = 0x4, scoped, tag = 'scoped memory for _dann_forward.1']
    #allocation13 [shape = 'u8[4096]{0}', space=vmem, size = 0x1000, scoped, tag = 'output window, operand 2, single buffered']
    %14 = vsyncpa [#allocation3], 0
    %15 = vsyncpa [#allocation6], 0
    %16 = vsyncpa [#allocation9], 0
    %17 = vsyncpa [#allocation4], 0
    %18 = vsyncpa [#allocation12], 0
    // Predicated region
    $region2: #{_dann_forward.1} parent=1 // pred_check
      _
    $region3: #{_dann_forward.1} parent=1 // pred_check_branch
      %20 = sbr.rel (0) target = $region5
    $region4: #{_dann_forward.1} parent=1 // pred_region
      %22 = vsyncadd [#allocation3], 0
      %s24 = sshll.u32 %s0, 4
      %s25 = int_to_ptr.hbm [resolvable:$true] %s24
      %s26 = sshll.u32 [#allocation2], 4
      %s27 = int_to_ptr.vmem [resolvable:$true] %s26
      %29 = dma.hbm_to_vmem [thread:$0]  %s25, 128, %s27, [#allocation3]
    $region5: #{_dann_forward.1} parent=1 // pred_fallthru
      _
    // Predicated region
    $region6: #{_dann_forward.1} parent=1 // pred_check
      _
    $region7: #{_dann_forward.1} parent=1 // pred_check_branch
      %31 = sbr.rel (0) target = $region9
    $region8: #{_dann_forward.1} parent=1 // pred_region
      %33 = vsyncadd [#allocation6], 0
      %s35 = sshll.u32 %s1, 4
      %s36 = int_to_ptr.hbm [resolvable:$true] %s35
      %s37 = sshll.u32 [#allocation5], 4
      %s38 = int_to_ptr.vmem [resolvable:$true] %s37
      %40 = dma.hbm_to_vmem [thread:$0]  %s36, 128, %s38, [#allocation6]
    $region9: #{_dann_forward.1} parent=1 // pred_fallthru
      _
    // Predicated region
    $region10: #{_dann_forward.1} parent=1 // pred_check
      _
    $region11: #{_dann_forward.1} parent=1 // pred_check_branch
      %42 = sbr.rel (0) target = $region13
    $region12: #{_dann_forward.1} parent=1 // pred_region
      %44 = vsyncadd [#allocation6], 0
      %s45 = sshll.u32 %s2, 4
      %s46 = int_to_ptr.hbm [resolvable:$true] %s45
      %s47 = sshll.u32 [#allocation7], 4
      %s48 = int_to_ptr.vmem [resolvable:$true] %s47
      %53 = dma.hbm_to_vmem [thread:$0]  %s46, 2048, %s48, [#allocation6], 128, 128, 8
    $region13: #{_dann_forward.1} parent=1 // pred_fallthru
      _
    // Predicated region
    $region14: #{_dann_forward.1} parent=1 // pred_check
      _
    $region15: #{_dann_forward.1} parent=1 // pred_check_branch
      %55 = sbr.rel (0) target = $region17
    $region16: #{_dann_forward.1} parent=1 // pred_region
      _
    $region17: #{_dann_forward.1} parent=1 // pred_fallthru
      _
    // Predicated region
    $region18: #{_dann_forward.1} parent=1 // pred_check
      _
    $region19: #{_dann_forward.1} parent=1 // pred_check_branch
      %57 = sbr.rel (0) target = $region21
    $region20: #{_dann_forward.1} parent=1 // pred_region
      %59 = vsyncadd [#allocation9], 0
      %s60 = sshll.u32 %s4, 4
      %s61 = int_to_ptr.hbm [resolvable:$true] %s60
      %s62 = sshll.u32 [#allocation8], 4
      %s63 = int_to_ptr.vmem [resolvable:$true] %s62
      %68 = dma.hbm_to_vmem [thread:$0]  %s61, 2048, %s63, [#allocation9], 128, 128, 8
    $region21: #{_dann_forward.1} parent=1 // pred_fallthru
      _
    // Predicated region
    $region22: #{_dann_forward.1} parent=1 // pred_check
      _
    $region23: #{_dann_forward.1} parent=1 // pred_check_branch
      %70 = sbr.rel (0) target = $region25
    $region24: #{_dann_forward.1} parent=1 // pred_region
      _
    $region25: #{_dann_forward.1} parent=1 // pred_fallthru
      _
    // Predicated region
    $region26: #{_dann_forward.1} parent=1 // pred_check
      _
    $region27: #{_dann_forward.1} parent=1 // pred_check_branch
      %72 = sbr.rel (0) target = $region29
    $region28: #{_dann_forward.1} parent=1 // pred_region
      %74 = dma.done [#allocation3], 128
    $region29: #{_dann_forward.1} parent=1 // pred_fallthru
      _
    // Predicated region
    $region30: #{_dann_forward.1} parent=1 // pred_check
      _
    $region31: #{_dann_forward.1} parent=1 // pred_check_branch
      %76 = sbr.rel (0) target = $region33
    $region32: #{_dann_forward.1} parent=1 // pred_region
      %78 = dma.done [#allocation6], 128
    $region33: #{_dann_forward.1} parent=1 // pred_fallthru
      _
    // Predicated region
    $region34: #{_dann_forward.1} parent=1 // pred_check
      _
    $region35: #{_dann_forward.1} parent=1 // pred_check_branch
      %80 = sbr.rel (0) target = $region37
    $region36: #{_dann_forward.1} parent=1 // pred_region
      %82 = dma.done [#allocation6], 2048
    $region37: #{_dann_forward.1} parent=1 // pred_fallthru
      _
    // Predicated region
    $region38: #{_dann_forward.1} parent=1 // pred_check
      _
    $region39: #{_dann_forward.1} parent=1 // pred_check_branch
      %84 = sbr.rel (0) target = $region41
    $region40: #{_dann_forward.1} parent=1 // pred_region
      %86 = dma.done [#allocation9], 2048
    $region41: #{_dann_forward.1} parent=1 // pred_fallthru
      _
    %v87 = vld [vmem:[%s3] sm:$0x1]
    %v88 = vld [vmem:[#allocation2] sm:$0xff]
    %v89 = vld [vmem:[#allocation7] sm:$0xff]
    %v90 = vld [vmem:[#allocation7 + $0x8] sm:$0xff]
    %v91 = vld [vmem:[#allocation7 + $0x10] sm:$0xff]
    %v92 = vld [vmem:[#allocation7 + $0x18] sm:$0xff]
    %v93 = vld [vmem:[#allocation7 + $0x20] sm:$0xff]
    %v94 = vld [vmem:[#allocation7 + $0x28] sm:$0xff]
    %v95 = vld [vmem:[#allocation7 + $0x30] sm:$0xff]
    %v96 = vld [vmem:[#allocation7 + $0x38] sm:$0xff]
    %v97 = vld [vmem:[#allocation7 + $0x40] sm:$0xff]
    %v98 = vld [vmem:[#allocation7 + $0x48] sm:$0xff]
    %v99 = vld [vmem:[#allocation7 + $0x50] sm:$0xff]
    %v100 = vld [vmem:[#allocation7 + $0x58] sm:$0xff]
    %v101 = vld [vmem:[#allocation7 + $0x60] sm:$0xff]
    %v102 = vld [vmem:[#allocation7 + $0x68] sm:$0xff]
    %v103 = vld [vmem:[#allocation7 + $0x70] sm:$0xff]
    %v104 = vld [vmem:[#allocation7 + $0x78] sm:$0xff]
    %v106 = vperm.slane %v87, 0
    %108 = vmatpush.msra.mxu0 %v104
    %109 = vmatpush.msra.mxu0 %v103
    %110 = vmatpush.msra.mxu0 %v102
    %111 = vmatpush.msra.mxu0 %v101
    %112 = vmatpush.msra.mxu0 %v100
    %113 = vmatpush.msra.mxu0 %v99
    %114 = vmatpush.msra.mxu0 %v98
    %115 = vmatpush.msra.mxu0 %v97
    %116 = vmatpush.msra.mxu0 %v96
    %117 = vmatpush.msra.mxu0 %v95
    %118 = vmatpush.msra.mxu0 %v94
    %119 = vmatpush.msra.mxu0 %v93
    %120 = vmatpush.msra.mxu0 %v92
    %121 = vmatpush.msra.mxu0 %v91
    %122 = vmatpush.msra.mxu0 %v90
    %123 = vmatpush.msra.mxu0 %v89
    %124 = vmatmul.f32.gmra.mxu0 %v88
    %v125 = vpop.f32.mrf.mxu0
    %v126 = vadd.f32 %v106, %v125
    %127 = vdwg.mxu0
    %v128 = vmax.f32 %v126, 0.0
    %129 = vst [vmem:[#allocation11] sm:$0xff] %v128
    %v130 = vld [vmem:[#allocation5] sm:$0xff]
    %v131 = vld [vmem:[#allocation7] sm:$0xff]
    %v132 = vld [vmem:[#allocation7 + $0x8] sm:$0xff]
    %v133 = vld [vmem:[#allocation7 + $0x10] sm:$0xff]
    %v134 = vld [vmem:[#allocation7 + $0x18] sm:$0xff]
    %v135 = vld [vmem:[#allocation7 + $0x20] sm:$0xff]
    %v136 = vld [vmem:[#allocation7 + $0x28] sm:$0xff]
    %v137 = vld [vmem:[#allocation7 + $0x30] sm:$0xff]
    %v138 = vld [vmem:[#allocation7 + $0x38] sm:$0xff]
    %v139 = vld [vmem:[#allocation7 + $0x40] sm:$0xff]
    %v140 = vld [vmem:[#allocation7 + $0x48] sm:$0xff]
    %v141 = vld [vmem:[#allocation7 + $0x50] sm:$0xff]
    %v142 = vld [vmem:[#allocation7 + $0x58] sm:$0xff]
    %v143 = vld [vmem:[#allocation7 + $0x60] sm:$0xff]
    %v144 = vld [vmem:[#allocation7 + $0x68] sm:$0xff]
    %v145 = vld [vmem:[#allocation7 + $0x70] sm:$0xff]
    %v146 = vld [vmem:[#allocation7 + $0x78] sm:$0xff]
    %147 = vmatpush.msra.mxu0 %v146
    %148 = vmatpush.msra.mxu0 %v145
    %149 = vmatpush.msra.mxu0 %v144
    %150 = vmatpush.msra.mxu0 %v143
    %151 = vmatpush.msra.mxu0 %v142
    %152 = vmatpush.msra.mxu0 %v141
    %153 = vmatpush.msra.mxu0 %v140
    %154 = vmatpush.msra.mxu0 %v139
    %155 = vmatpush.msra.mxu0 %v138
    %156 = vmatpush.msra.mxu0 %v137
    %157 = vmatpush.msra.mxu0 %v136
    %158 = vmatpush.msra.mxu0 %v135
    %159 = vmatpush.msra.mxu0 %v134
    %160 = vmatpush.msra.mxu0 %v133
    %161 = vmatpush.msra.mxu0 %v132
    %162 = vmatpush.msra.mxu0 %v131
    %163 = vmatmul.f32.gmra.mxu0 %v130
    %v164 = vpop.f32.mrf.mxu0
    %v165 = vadd.f32 %v106, %v164
    %166 = vdwg.mxu0
    %v167 = vmax.f32 %v165, 0.0
    %168 = vst [vmem:[#allocation13] sm:$0xff] %v167
    %v169 = vld [vmem:[#allocation11] sm:$0xff]
    %v170 = vld [vmem:[#allocation8] sm:$0xff]
    %v171 = vld [vmem:[#allocation8 + $0x8] sm:$0xff]
    %v172 = vld [vmem:[#allocation8 + $0x10] sm:$0xff]
    %v173 = vld [vmem:[#allocation8 + $0x18] sm:$0xff]
    %v174 = vld [vmem:[#allocation8 + $0x20] sm:$0xff]
    %v175 = vld [vmem:[#allocation8 + $0x28] sm:$0xff]
    %v176 = vld [vmem:[#allocation8 + $0x30] sm:$0xff]
    %v177 = vld [vmem:[#allocation8 + $0x38] sm:$0xff]
    %v178 = vld [vmem:[#allocation8 + $0x40] sm:$0xff]
    %v179 = vld [vmem:[#allocation8 + $0x48] sm:$0xff]
    %v180 = vld [vmem:[#allocation8 + $0x50] sm:$0xff]
    %v181 = vld [vmem:[#allocation8 + $0x58] sm:$0xff]
    %v182 = vld [vmem:[#allocation8 + $0x60] sm:$0xff]
    %v183 = vld [vmem:[#allocation8 + $0x68] sm:$0xff]
    %v184 = vld [vmem:[#allocation8 + $0x70] sm:$0xff]
    %v185 = vld [vmem:[#allocation8 + $0x78] sm:$0xff]
    %v186 = vld [vmem:[%s5] sm:$0x1]
    %v188 = vperm.slane %v186, 0
    %190 = vmatpush.msra.mxu0 %v185
    %191 = vmatpush.msra.mxu0 %v184
    %192 = vmatpush.msra.mxu0 %v183
    %193 = vmatpush.msra.mxu0 %v182
    %194 = vmatpush.msra.mxu0 %v181
    %195 = vmatpush.msra.mxu0 %v180
    %196 = vmatpush.msra.mxu0 %v179
    %197 = vmatpush.msra.mxu0 %v178
    %198 = vmatpush.msra.mxu0 %v177
    %199 = vmatpush.msra.mxu0 %v176
    %200 = vmatpush.msra.mxu0 %v175
    %201 = vmatpush.msra.mxu0 %v174
    %202 = vmatpush.msra.mxu0 %v173
    %203 = vmatpush.msra.mxu0 %v172
    %204 = vmatpush.msra.mxu0 %v171
    %205 = vmatpush.msra.mxu0 %v170
    %206 = vmatmul.f32.gmra.mxu0 %v169
    %v207 = vpop.f32.mrf.mxu0
    %v208 = vadd.f32 %v188, %v207
    %209 = vdwg.mxu0
    %210 = vst [vmem:[#allocation10] sm:$0xff] %v208
    // Predicated region
    $region42: #{_dann_forward.1} parent=1 // pred_check
      _
    $region43: #{_dann_forward.1} parent=1 // pred_check_branch
      %212 = sbr.rel (0) target = $region45
    $region44: #{_dann_forward.1} parent=1 // pred_region
      %214 = vsyncadd [#allocation4], 0
      %s216 = sshll.u32 [#allocation10], 4
      %s217 = int_to_ptr.vmem [resolvable:$true] %s216
      %s218 = sshll.u32 %s6, 4
      %s219 = int_to_ptr.hbm [resolvable:$true] %s218
      %221 = dma.vmem_to_hbm [thread:$0]  %s217, 128, %s219, [#allocation4]
    $region45: #{_dann_forward.1} parent=1 // pred_fallthru
      _
    // Predicated region
    $region46: #{_dann_forward.1} parent=1 // pred_check
      _
    $region47: #{_dann_forward.1} parent=1 // pred_check_branch
      %223 = sbr.rel (0) target = $region49
    $region48: #{_dann_forward.1} parent=1 // pred_region
      %225 = vsyncadd [#allocation12], 0
      %s227 = sshll.u32 [#allocation11], 4
      %s228 = int_to_ptr.vmem [resolvable:$true] %s227
      %s229 = sshll.u32 %s7, 4
      %s230 = int_to_ptr.hbm [resolvable:$true] %s229
      %232 = dma.vmem_to_hbm [thread:$0]  %s228, 128, %s230, [#allocation12]
    $region49: #{_dann_forward.1} parent=1 // pred_fallthru
      _
    // Predicated region
    $region50: #{_dann_forward.1} parent=1 // pred_check
      _
    $region51: #{_dann_forward.1} parent=1 // pred_check_branch
      %234 = sbr.rel (0) target = $region53
    $region52: #{_dann_forward.1} parent=1 // pred_region
      %236 = vsyncadd [#allocation12], 0
      %s238 = sshll.u32 [#allocation13], 4
      %s239 = int_to_ptr.vmem [resolvable:$true] %s238
      %s240 = sshll.u32 %s8, 4
      %s241 = int_to_ptr.hbm [resolvable:$true] %s240
      %243 = dma.vmem_to_hbm [thread:$0]  %s239, 128, %s241, [#allocation12]
    $region53: #{_dann_forward.1} parent=1 // pred_fallthru
      _
    // Predicated region
    $region54: #{_dann_forward.1} parent=1 // pred_check
      _
    $region55: #{_dann_forward.1} parent=1 // pred_check_branch
      %245 = sbr.rel (0) target = $region57
    $region56: #{_dann_forward.1} parent=1 // pred_region
      %247 = dma.done [#allocation4], 128
    $region57: #{_dann_forward.1} parent=1 // pred_fallthru
      _
    // Predicated region
    $region58: #{_dann_forward.1} parent=1 // pred_check
      _
    $region59: #{_dann_forward.1} parent=1 // pred_check_branch
      %249 = sbr.rel (0) target = $region61
    $region60: #{_dann_forward.1} parent=1 // pred_region
      %251 = dma.done [#allocation12], 128
    $region61: #{_dann_forward.1} parent=1 // pred_fallthru
      _
    // Predicated region
    $region62: #{_dann_forward.1} parent=1 // pred_check
      _
    $region63: #{_dann_forward.1} parent=1 // pred_check_branch
      %253 = sbr.rel (0) target = $region65
    $region64: #{_dann_forward.1} parent=1 // pred_region
      %255 = dma.done [#allocation12], 128
    $region65: #{_dann_forward.1} parent=1 // pred_fallthru
      _
    %256 = vsyncpa [#allocation3], 1
    %257 = vsyncpa [#allocation6], 1
    %258 = vsyncpa [#allocation9], 1
    %259 = vsyncpa [#allocation4], 1
    %260 = vsyncpa [#allocation12], 1

</llo_original>
